<compile_context>
chip_gen: v5e
topology: v5e:2x2
jax: 0.10.0
libtpu: 0.0.40
codegen_flags: <defaults>
</compile_context>

<pallas_src>
import jax
import jax.numpy as jnp
import numpy as np
from jax.experimental import pallas as pl
from jax.experimental.pallas import tpu as pltpu

_LANE = 128
_VMEM_TILE_BUDGET = 24 * 1024 * 1024   # bytes for double-buffered tiles + resident weights
_VMEM_LIMIT = 40 * 1024 * 1024         # scoped VMEM limit; safe on v5e/v6e/v7x


def _round_up(x, m):
    return (x + m - 1) // m * m


def _cdiv(a, b):
    return -(-a // b)


def _pick_ts(s, n_batch, c_in, c_out, x_bytes, out_bytes):
    """Spatial (lane) tile: largest that fits the VMEM budget, lane-aligned, with an
    even total grid-step count where cheap (v7x two-TensorCore balance)."""
    if s <= _LANE:
        return int(s)                                   # full-dim block is always legal
    per_col = 2 * (c_in * x_bytes + c_out * out_bytes)  # 2x: double-buffered in/out tiles
    fixed = c_in * c_out * x_bytes + 2 * c_out * 4      # resident folded W + bias
    ts = max((_VMEM_TILE_BUDGET - fixed) // per_col, _LANE)
    ts = min(ts, 8192)                                  # raised cap (per-step overhead on v7x)
    ts = min(ts, s)
    ts = max((ts // _LANE) * _LANE, _LANE)              # lane-dense (unmasked) stores
    # v7x megacore: an odd total step count gives a 2:1 core imbalance; nudge it even.
    steps = _cdiv(s, ts)
    if n_batch * steps > 1 and (n_batch * steps) % 2 == 1:
        ts2 = max(_round_up(_cdiv(s, steps + 1), _LANE), _LANE)
        if ts2 <= s and (n_batch * _cdiv(s, ts2)) % 2 == 0:
            ts = ts2
    return int(ts)


def _conv1x1_bn_kernel(x_ref, w_ref, bias_ref, o_ref):
    # (C_out, C_in) @ (C_in, ts) on the MXU with f32 accumulation, then the folded
    # BatchNorm bias add in f32 (scale already folded into the weights).
    acc = jnp.dot(w_ref[...], x_ref[...], preferred_element_type=jnp.float32)
    o_ref[...] = (acc + bias_ref[...]).astype(o_ref.dtype)


def _conv1x1_bn_pallas(x_s3d, w_scaled, bias, out_dtype):
    """x_s3d: (N, C_in, S) bf16;  w_scaled: (C_out, C_in) bf16;  bias: (C_out, 1) f32."""
    n, c_in, s = x_s3d.shape
    c_out = w_scaled.shape[0]
    ts = _pick_ts(s, n, c_in, c_out, x_s3d.dtype.itemsize, jnp.dtype(out_dtype).itemsize)
    grid = (n, _cdiv(s, ts))   # ragged last spatial tile: padded reads, masked writes

    return pl.pallas_call(
        _conv1x1_bn_kernel,
        out_shape=jax.ShapeDtypeStruct((n, c_out, s), out_dtype),
        grid_spec=pltpu.PrefetchScalarGridSpec(
            num_scalar_prefetch=0,
            grid=grid,
            in_specs=[
                # batch dim squeezed out of the kernel view
                pl.BlockSpec((None, c_in, ts), lambda b, si: (b, 0, si)),
                pl.BlockSpec((c_out, c_in), lambda b, si: (0, 0)),
                pl.BlockSpec((c_out, 1), lambda b, si: (0, 0)),
            ],
            out_specs=pl.BlockSpec((None, c_out, ts), lambda b, si: (b, 0, si)),
        ),
        compiler_params=pltpu.CompilerParams(
            dimension_semantics=("parallel", "parallel"),
            vmem_limit_bytes=_VMEM_LIMIT,
        ),
    )(x_s3d, w_scaled, bias)


def make_identity_params(in_chs, out_chs, stride, key):
    """Deterministic parameter init mimicking the PyTorch module's __init__ shapes."""
    if in_chs == out_chs and stride == 1:
        return None   # true identity path
    # Conv2d(in_chs, out_chs, 1, stride, bias=False): weight (out_chs, in_chs, 1, 1)
    conv_w = jax.random.normal(key, (out_chs, in_chs, 1, 1), dtype=jnp.float32) * 0.1
    # BatchNorm2d(out_chs) defaults: gamma=1, beta=0, running_mean=0, running_var=1
    return dict(
        conv_w=conv_w,
        gamma=jnp.ones((out_chs,), jnp.float32),
        beta=jnp.zeros((out_chs,), jnp.float32),
        running_mean=jnp.zeros((out_chs,), jnp.float32),
        running_var=jnp.ones((out_chs,), jnp.float32),
    )


def identity_forward(x, params, stride, eps=1e-5, out_dtype=jnp.bfloat16):
    """x: (N, C_in, H, W) NCHW float32.

    out_dtype defaults to bf16 (HBM-bound op; halves the dominant output stream).
    Pass out_dtype=jnp.float32 for exact dtype parity with the PyTorch module.
    """
    if params is None:
        return x   # pass-through branch, no downsample

    conv_w = params["conv_w"]
    out_chs, in_chs = conv_w.shape[0], conv_w.shape[1]
    n, c, _, _ = x.shape
    assert c == in_chs

    # kernel_size=1, no padding, stride s -> sample positions 0, s, 2s, ...
    xs = x[:, :, ::stride, ::stride]
    ho, wo = xs.shape[2], xs.shape[3]
    s = ho * wo

    # NCHW-native: contiguous reshape to (N, C_in, Ho*Wo), no transpose.
    # One XLA pass performs the strided slice + bf16 cast (runs near HBM roofline).
    x_s3d = xs.reshape(n, in_chs, s).astype(jnp.bfloat16)

    # Fold eval-mode BatchNorm: scale into the weights (f32, then one bf16 cast),
    # bias stays f32 and is added in-kernel after the f32 accumulation.
    inv_std = params["gamma"] / jnp.sqrt(params["running_var"] + eps)
    w2d = conv_w.reshape(out_chs, in_chs)
    w_scaled = (w2d * inv_std[:, None]).astype(jnp.bfloat16)
    bias = (params["beta"] - params["running_mean"] * inv_std)
    bias = bias.reshape(out_chs, 1).astype(jnp.float32)

    out = _conv1x1_bn_pallas(x_s3d, w_scaled, bias, out_dtype)
    # (N, C_out, S) -> (N, C_out, Ho, Wo): contiguous reshape, no extra HBM pass.
    return out.reshape(n, out_chs, ho, wo)


def _reference_forward(x, params, stride, eps=1e-5):
    """Pure-JAX f32 reference of the PyTorch module (eval mode)."""
    if params is None:
        return x
    conv_w = params["conv_w"]
    out_chs, in_chs = conv_w.shape[0], conv_w.shape[1]
    xs = x[:, :, ::stride, ::stride]
    y = jnp.einsum("nchw,oc->nohw", xs, conv_w.reshape(out_chs, in_chs))
    inv_std = params["gamma"] / jnp.sqrt(params["running_var"] + eps)
    scale = inv_std[None, :, None, None]
    bias = (params["beta"] - params["running_mean"] * inv_std)[None, :, None, None]
    return y * scale + bias


if __name__ == "__main__":
    key = jax.random.PRNGKey(0)
    k_x1, k_p1, k_x2, k_p2, k_x3, k_p3 = jax.random.split(key, 6)

    # 1) Small downsample path (in_chs != out_chs, stride != 1); tiny channels,
    #    spatial 8*8=64 < 128 -> single full-dim spatial block per image.
    n, in_chs, out_chs, hh, ww, stride = 2, 4, 8, 16, 16, 2
    x = jax.random.normal(k_x1, (n, in_chs, hh, ww), dtype=jnp.float32)
    params = make_identity_params(in_chs, out_chs, stride, k_p1)
    y = jax.block_until_ready(identity_forward(x, params, stride))
    assert y.shape == (n, out_chs, hh // stride, ww // stride), y.shape
    y_ref = _reference_forward(x, params, stride)
    np.testing.assert_allclose(np.asarray(y, dtype=np.float32), np.asarray(y_ref),
                               rtol=5e-2, atol=5e-2)

    # 2) Realistic lane-aligned channels, spatial 7*7=49 (masked stores path).
    n2, ic2, oc2, h2, w2, s2 = 4, 128, 256, 14, 14, 2
    x2 = jax.random.normal(k_x2, (n2, ic2, h2, w2), dtype=jnp.float32)
    params2 = make_identity_params(ic2, oc2, s2, k_p2)
    y2 = jax.block_until_ready(identity_forward(x2, params2, s2))
    assert y2.shape == (n2, oc2, h2 // s2, w2 // s2), y2.shape
    y2_ref = _reference_forward(x2, params2, s2)
    np.testing.assert_allclose(np.asarray(y2, dtype=np.float32), np.asarray(y2_ref),
                               rtol=5e-2, atol=5e-2)

    # 3) Spatial 15*15=225 > 128 -> tiled spatial grid with a ragged (masked) edge tile.
    n3, ic3, oc3, h3, w3, s3 = 2, 8, 16, 30, 30, 2
    x3 = jax.random.normal(k_x3, (n3, ic3, h3, w3), dtype=jnp.float32)
    params3 = make_identity_params(ic3, oc3, s3, k_p3)
    y3 = jax.block_until_ready(identity_forward(x3, params3, s3))
    assert y3.shape == (n3, oc3, h3 // s3, w3 // s3), y3.shape
    y3_ref = _reference_forward(x3, params3, s3)
    np.testing.assert_allclose(np.asarray(y3, dtype=np.float32), np.asarray(y3_ref),
                               rtol=5e-2, atol=5e-2)

    # 4) Pass-through branch (in_chs == out_chs, stride == 1) -> no kernel, x unchanged.
    params_id = make_identity_params(in_chs, in_chs, 1, k_p1)
    y_id = jax.block_until_ready(identity_forward(x, params_id, 1))
    assert y_id.shape == x.shape

    print("KERNEL_OK")
</pallas_src>

<mosaic_0001>
module attributes {stable_mosaic.version = 11 : i64} {
  func.func @_conv1x1_bn_kernel(%arg0: i32, %arg1: i32, %arg2: memref<1x4x64xbf16, #tpu.memory_space<vmem>>, %arg3: memref<8x4xbf16, #tpu.memory_space<vmem>>, %arg4: memref<8x1xf32, #tpu.memory_space<vmem>>, %arg5: memref<1x8x64xbf16, #tpu.memory_space<vmem>>) attributes {dimension_semantics = [#tpu.dimension_semantics<parallel>, #tpu.dimension_semantics<parallel>], iteration_bounds = array<i64: 2, 1>, scalar_prefetch = 0 : i64, scratch_operands = 0 : i64, tpu.core_type = #tpu.core_type<tc>, window_params = [{transform_indices = @transform_0, window_bounds = array<i64: 1, 4, 64>}, {pipeline_mode = #tpu.pipeline_mode<synchronous>, transform_indices = @transform_1, window_bounds = array<i64: 8, 4>}, {pipeline_mode = #tpu.pipeline_mode<synchronous>, transform_indices = @transform_2, window_bounds = array<i64: 8, 1>}, {transform_indices = @transform_3, window_bounds = array<i64: 1, 8, 64>}]} {
    %c0 = arith.constant 0 : index
    %c0_0 = arith.constant 0 : index
    %0 = vector.load %arg3[%c0, %c0_0] : memref<8x4xbf16, #tpu.memory_space<vmem>>, vector<8x4xbf16>
    %c0_1 = arith.constant 0 : index
    %c0_2 = arith.constant 0 : index
    %c0_3 = arith.constant 0 : index
    %1 = vector.load %arg2[%c0_1, %c0_2, %c0_3] : memref<1x4x64xbf16, #tpu.memory_space<vmem>>, vector<1x4x64xbf16>
    %2 = vector.shape_cast %1 : vector<1x4x64xbf16> to vector<4x64xbf16>
    %cst = arith.constant dense<0.000000e+00> : vector<8x64xf32>
    %3 = tpu.matmul %0, %2, %cst {dimension_numbers = #tpu.dot_dimension_numbers<[1], [0], [0], [1], [0, 0, 1, 1], [], []>} : vector<8x4xbf16>, vector<4x64xbf16>, vector<8x64xf32> -> vector<8x64xf32>
    %c0_4 = arith.constant 0 : index
    %c0_5 = arith.constant 0 : index
    %4 = vector.load %arg4[%c0_4, %c0_5] : memref<8x1xf32, #tpu.memory_space<vmem>>, vector<8x1xf32>
    %5 = vector.broadcast %4 : vector<8x1xf32> to vector<8x64xf32>
    %6 = arith.addf %3, %5 : vector<8x64xf32>
    %7 = arith.truncf %6 : vector<8x64xf32> to vector<8x64xbf16>
    %c0_6 = arith.constant 0 : index
    %c0_7 = arith.constant 0 : index
    %c0_8 = arith.constant 0 : index
    %8 = vector.load %arg5[%c0_6, %c0_7, %c0_8] : memref<1x8x64xbf16, #tpu.memory_space<vmem>>, vector<1x8x64xbf16>
    %9 = vector.shape_cast %8 : vector<1x8x64xbf16> to vector<8x64xbf16>
    %10 = vector.shape_cast %7 : vector<8x64xbf16> to vector<1x8x64xbf16>
    tpu.vector_store %arg5[%c0_6, %c0_7, %c0_8], %10 {strides = array<i32>} : memref<1x8x64xbf16, #tpu.memory_space<vmem>>, vector<1x8x64xbf16>,
    return
  }
  func.func @transform_0(%arg0: i32, %arg1: i32) -> (i32, i32, i32) {
    %c0_i32 = arith.constant 0 : i32
    %c0_i32_0 = arith.constant 0 : i32
    return %arg0, %c0_i32, %arg1 : i32, i32, i32
  }
  func.func @transform_1(%arg0: i32, %arg1: i32) -> (i32, i32) {
    %c0_i32 = arith.constant 0 : i32
    %c0_i32_0 = arith.constant 0 : i32
    %c0_i32_1 = arith.constant 0 : i32
    return %c0_i32, %c0_i32_0 : i32, i32
  }
  func.func @transform_2(%arg0: i32, %arg1: i32) -> (i32, i32) {
    %c0_i32 = arith.constant 0 : i32
    %c0_i32_0 = arith.constant 0 : i32
    %c0_i32_1 = arith.constant 0 : i32
    return %c0_i32, %c0_i32_0 : i32, i32
  }
  func.func @transform_3(%arg0: i32, %arg1: i32) -> (i32, i32, i32) {
    %c0_i32 = arith.constant 0 : i32
    %c0_i32_0 = arith.constant 0 : i32
    return %arg0, %c0_i32, %arg1 : i32, i32, i32
  }
}

</mosaic_0001>

<llo_original>
// kernel: tpu_custom_call.1
$region0: #{tpu_custom_call.1}
  #allocation0 [shape = 'u32[]', space=smem, size = 0x4, offset = 0x4, fixed_abs, tag = 'smem constant byte address 0x4 - core index']
  #allocation1 [shape = 'u32[72,128]{1,0:T(1,128)}', space=vmem, size = 0x9000, scoped, tag = 'internal scratch']
  %s0 = inlined_call_operand.vmem [shape: bf16[2,4,64], index: 0, kind: input, shape index: {}]
  %s1 = inlined_call_operand.vmem [shape: bf16[8,4], index: 1, kind: input, shape index: {}]
  %s2 = inlined_call_operand.vmem [shape: f32[8,1], index: 2, kind: input, shape index: {}]
  %s3 = inlined_call_operand.hbm [shape: bf16[2,8,64], index: 3, kind: output, shape index: {}]
  %s4 = sld [smem:[#allocation0]]
  $region45: #{tpu_custom_call.1} parent=0
    _
  %s6 = ssub.s32 1, %s4
  %s7 = scalar_select 0, %s6, %s4
  $region1: #{tpu_custom_call.1} parent=0
    #allocation2 [shape = 'u8[4096]{0}', space=vmem, size = 0x1000, scoped, tag = 'output window, operand 0']
    #allocation3 [shape = 's32[2]{0}', space=sflag, size = 0x8, scoped, tag = 'scoped memory for tpu_custom_call.1']
    %8 = vsyncpa [#allocation3], 0
    %s9 = scalar_lea.sflag [#allocation3], 1
    %10 = vsyncpa %s9, 0
    loop: start=0, step=1, limit=4
    $region2: #{tpu_custom_call.1} parent=1 // loop_pre_header
      _
    $region3: #{tpu_custom_call.1} parent=1 // loop_header
      %s12 = sphi 0, %s16
      %p13 = scmp.ge.s32.totalorder %s12, 4
      %s19 = sphi 0, %s31
      %s20 = sphi 0, %s27
      %s21 = sphi 0, %s19
      %s22 = sphi 0, %s20
      %s23 = sphi 0, %s21
      %s24 = sphi 0, %s22
      %s36 = sphi 0, %s38
      %s39 = sphi 0, %s36
      %s40 = sphi 0, %s39
      %s56 = sphi 0, %s40
      %s60 = sphi 0, %s60
      %s62 = sphi 0, %s60
      %s63 = sphi 0, %s62
      %s77 = sphi 0, %s63
      %s81 = sphi 0, %s81
      %s83 = sphi 0, %s81
      %s84 = sphi 0, %s83
      %s98 = sphi 0, %s84
      %s106 = sphi 0, %s108
      %s109 = sphi 0, %s106
      %s110 = sphi 0, %s109
      %s126 = sphi 0, %s110
    $region4: #{tpu_custom_call.1} parent=1 // loop_header_branch
      %15 = sbr.rel (%p13) target = $region8
    $region5: #{tpu_custom_call.1} parent=1 // loop_body
      %s17 = ssub.s32 %s12, 1
      %s18 = ssub.s32 %s12, 2
      %s25 = sadd.s32 1, %s20
      %p26 = scmp.ge.s32.totalorder %s25, 1
      %s27 = scalar_select %p26, 0, %s25
      %s28 = sadd.s32 1, %s19
      %s29 = scalar_select %p26, %s28, %s19
      %p30 = scmp.ge.s32.totalorder %s29, 2
      %s31 = scalar_select %p30, 0, %s29
      %s32 = ssub.s32 %s19, %s31
      %s33 = ssub.s32 %s20, %s27
      %s34 = sor.u32 %s32, %s33
      %p35 = scmp.eq.s32.totalorder %s34, 0
      %s37 = sadd.s32 %s36, 1
      %s38 = scalar_select %p35, %s36, %s37
      %p41 = pneg %p35
      %p42 = scmp.eq.s32.totalorder %s12, 1
      %p43 = por %p41, %p42
      %p44 = scmp.ne.s32.totalorder %s36, %s39
      %p45 = scmp.eq.s32.totalorder %s12, 0
      %p46 = por %p44, %p45
      %p47 = scmp.ne.s32.totalorder %s36, %s39
      %p48 = scmp.eq.s32.totalorder %s17, 1
      %p49 = por %p47, %p48
      %p50 = scmp.ne.s32.totalorder %s39, %s40
      %p51 = scmp.eq.s32.totalorder %s17, 0
      %p52 = por %p50, %p51
      %p53 = scmp.ne.s32.totalorder %s39, %s40
      %p54 = scmp.eq.s32.totalorder %s18, 1
      %p55 = por %p53, %p54
      %p57 = scmp.ne.s32.totalorder %s40, %s56
      %p58 = scmp.eq.s32.totalorder %s18, 0
      %p59 = por %p57, %p58
      %s61 = sadd.s32 %s60, 1
      %p64 = scmp.eq.s32.totalorder %s12, 1
      %p65 = scmp.ne.s32.totalorder %s60, %s62
      %p66 = scmp.eq.s32.totalorder %s12, 0
      %p67 = por %p65, %p66
      %p68 = scmp.ne.s32.totalorder %s60, %s62
      %p69 = scmp.eq.s32.totalorder %s17, 1
      %p70 = por %p68, %p69
      %p71 = scmp.ne.s32.totalorder %s62, %s63
      %p72 = scmp.eq.s32.totalorder %s17, 0
      %p73 = por %p71, %p72
      %p74 = scmp.ne.s32.totalorder %s62, %s63
      %p75 = scmp.eq.s32.totalorder %s18, 1
      %p76 = por %p74, %p75
      %p78 = scmp.ne.s32.totalorder %s63, %s77
      %p79 = scmp.eq.s32.totalorder %s18, 0
      %p80 = por %p78, %p79
      %s82 = sadd.s32 %s81, 1
      %p85 = scmp.eq.s32.totalorder %s12, 1
      %p86 = scmp.ne.s32.totalorder %s81, %s83
      %p87 = scmp.eq.s32.totalorder %s12, 0
      %p88 = por %p86, %p87
      %p89 = scmp.ne.s32.totalorder %s81, %s83
      %p90 = scmp.eq.s32.totalorder %s17, 1
      %p91 = por %p89, %p90
      %p92 = scmp.ne.s32.totalorder %s83, %s84
      %p93 = scmp.eq.s32.totalorder %s17, 0
      %p94 = por %p92, %p93
      %p95 = scmp.ne.s32.totalorder %s83, %s84
      %p96 = scmp.eq.s32.totalorder %s18, 1
      %p97 = por %p95, %p96
      %p99 = scmp.ne.s32.totalorder %s84, %s98
      %p100 = scmp.eq.s32.totalorder %s18, 0
      %p101 = por %p99, %p100
      %s102 = ssub.s32 %s19, %s31
      %s103 = ssub.s32 %s20, %s27
      %s104 = sor.u32 %s102, %s103
      %p105 = scmp.eq.s32.totalorder %s104, 0
      %s107 = sadd.s32 %s106, 1
      %s108 = scalar_select %p105, %s106, %s107
      %p111 = pneg %p105
      %p112 = scmp.eq.s32.totalorder %s12, 1
      %p113 = por %p111, %p112
      %p114 = scmp.ne.s32.totalorder %s106, %s109
      %p115 = scmp.eq.s32.totalorder %s12, 0
      %p116 = por %p114, %p115
      %p117 = scmp.ne.s32.totalorder %s106, %s109
      %p118 = scmp.eq.s32.totalorder %s17, 1
      %p119 = por %p117, %p118
      %p120 = scmp.ne.s32.totalorder %s109, %s110
      %p121 = scmp.eq.s32.totalorder %s17, 0
      %p122 = por %p120, %p121
      %p123 = scmp.ne.s32.totalorder %s109, %s110
      %p124 = scmp.eq.s32.totalorder %s18, 1
      %p125 = por %p123, %p124
      %p127 = scmp.ne.s32.totalorder %s110, %s126
      %p128 = scmp.eq.s32.totalorder %s18, 0
      %p129 = por %p127, %p128
      %p130 = scmp.le.s32.totalorder 1, %s12
      %p131 = scmp.lt.s32.totalorder %s12, 3
      %p132 = pnand %p130, %p131
      %p133 = pneg %p132
      // Predicated region
      $region9: #{tpu_custom_call.1} parent=5 // pred_check
        _
      $region10: #{tpu_custom_call.1} parent=5 // pred_check_branch
        %135 = sbr.rel (%p132) target = $region12
      $region11: #{tpu_custom_call.1} parent=5 // pred_region
        %s136 = ssub.s32 %s12, 1
        // Predicated region
        $region13: #{tpu_custom_call.1} parent=11 // pred_check
          %p137 = pneg %p73
        $region14: #{tpu_custom_call.1} parent=11 // pred_check_branch
          %139 = sbr.rel (%p137) target = $region16
        $region15: #{tpu_custom_call.1} parent=11 // pred_region
          _
        $region16: #{tpu_custom_call.1} parent=11 // pred_fallthru
          _
        // Predicated region
        $region17: #{tpu_custom_call.1} parent=11 // pred_check
          %p140 = pneg %p94
        $region18: #{tpu_custom_call.1} parent=11 // pred_check_branch
          %142 = sbr.rel (%p140) target = $region20
        $region19: #{tpu_custom_call.1} parent=11 // pred_region
          _
        $region20: #{tpu_custom_call.1} parent=11 // pred_fallthru
          _
      $region12: #{tpu_custom_call.1} parent=5 // pred_fallthru
        _
      %p143 = scmp.lt.s32.totalorder %s12, 2
      // Predicated region
      $region21: #{tpu_custom_call.1} parent=5 // pred_check
        %p144 = pneg %p143
      $region22: #{tpu_custom_call.1} parent=5 // pred_check_branch
        %146 = sbr.rel (%p144) target = $region24
      $region23: #{tpu_custom_call.1} parent=5 // pred_region
        // Predicated region
        $region25: #{tpu_custom_call.1} parent=23 // pred_check
          %p147 = pneg %p46
        $region26: #{tpu_custom_call.1} parent=23 // pred_check_branch
          %149 = sbr.rel (%p147) target = $region28
        $region27: #{tpu_custom_call.1} parent=23 // pred_region
          %p150 = scmp.lt.s32.totalorder %s19, 1
          %s151 = scalar_select %p150, %s19, 1
          %p152 = scmp.lt.s32.totalorder %s20, 0
          %s153 = scalar_select %p152, %s20, 0
          %s154 = sadd.s32 %s153, %s151
          %s155 = smul.addr %s154, 2
          %s156 = scalar_lea.vmem %s0, %s155
        $region28: #{tpu_custom_call.1} parent=23 // pred_fallthru
          _
      $region24: #{tpu_custom_call.1} parent=5 // pred_fallthru
        _
      %p157 = scmp.le.s32.totalorder 1, %s12
      %p158 = scmp.lt.s32.totalorder %s12, 3
      %p159 = pnand %p157, %p158
      %p160 = pneg %p159
      // Predicated region
      $region29: #{tpu_custom_call.1} parent=5 // pred_check
        _
      $region30: #{tpu_custom_call.1} parent=5 // pred_check_branch
        %162 = sbr.rel (%p159) target = $region32
      $region31: #{tpu_custom_call.1} parent=5 // pred_region
        %s163 = ssub.s32 %s12, 1
        %p164 = scmp.lt.s32.totalorder %s21, 1
        %s165 = scalar_select %p164, %s21, 1
        %p166 = scmp.lt.s32.totalorder %s22, 0
        %s167 = scalar_select %p166, %s22, 0
        %s168 = sadd.s32 %s167, %s165
        %s169 = smul.addr %s168, 2
        %s170 = scalar_lea.vmem %s0, %s169
        %p171 = pneg %p52
        %p172 = pneg %p49
        %p173 = pneg %p73
        %p174 = pneg %p70
        %p175 = pneg %p94
        %p176 = pneg %p91
        %p177 = pneg %p122
        %p178 = pneg %p119
        %s179 = sand.u32 %s109, 1
        %s180 = scalar_lea.sflag [#allocation3], %s179
        %s181 = sand.u32 %s109, 1
        %s182 = smul.addr %s181, 4
        %s183 = scalar_lea.vmem [#allocation2], %s182
        %p184 = scmp.lt.s32.totalorder %s21, 1
        %s185 = scalar_select %p184, %s21, 1
        %p186 = scmp.lt.s32.totalorder %s22, 0
        %s187 = scalar_select %p186, %s22, 0
        %s188 = sadd.s32 %s187, %s185
        %s189 = smul.addr %s188, 2
        %s190 = scalar_lea.vmem %s0, %s189
        %v192 = vld [vmem:[%s1] sm:$0xf]
        %v193 = vld [vmem:[%s190] sm:$0x3]
        %v194 = vld [vmem:[%s2] sm:$0xff]
        %196 = vset.pattern.permute.xlu0 0
        %197 = vperm.xlu0 %196, %v194
        %v198 = vpop.permute.xlu0 %197
        %vm200 = vcmask 31744
        %v202 = vsel %vm200, %v192, 0
        %vm204 = vcmask 1041408
        %v206 = vsel %vm204, %v193, 0
        %208 = vmatpush.bf16.msra.mxu0 0
        %209 = vmatpush.bf16.msra.mxu0 0
        %210 = vmatpush.bf16.msra.mxu0 0
        %211 = vmatpush.bf16.msra.mxu0 0
        %212 = vmatpush.bf16.msra.mxu0 0
        %213 = vmatpush.bf16.msra.mxu0 0
        %214 = vmatpush.bf16.msra.mxu0 0
        %215 = vmatpush.bf16.msra.mxu0 %v206
        %216 = vmatmul.bf16.gmra.mxu0 %v202
        %v217 = vpop.f32.mrf.mxu0
        %v218 = vadd.f32 %v198, %v217
        %v219 = vpop.f32.mrf.mxu0
        %220 = vdwg.mxu0
        %v221 = vpack.c.bf16 %v218, %v218
        %vm222 = vcmask 519168
        %223 = vst.msk [vmem:[%s183] sm:$0xf] %vm222, %v221
        %s224 = sand.u32 %s109, 1
        %s225 = scalar_lea.sflag [#allocation3], %s224
        %s226 = sand.u32 %s109, 1
        %s227 = smul.addr %s226, 4
        %s228 = scalar_lea.vmem [#allocation2], %s227
        // Predicated region
        $region33: #{tpu_custom_call.1} parent=31 // pred_check
          %p229 = pneg %p119
        $region34: #{tpu_custom_call.1} parent=31 // pred_check_branch
          %231 = sbr.rel (%p229) target = $region36
        $region35: #{tpu_custom_call.1} parent=31 // pred_region
          %233 = vsyncadd %s225, 0
          %s234 = sadd.s32 %s22, %s21
          %s235 = smul.addr %s234, 4
          %s236 = scalar_lea.hbm %s3, %s235
          %s238 = sshll.u32 %s228, 4
          %s239 = int_to_ptr.vmem [resolvable:$true] %s238
          %s240 = sshll.u32 %s236, 4
          %s241 = int_to_ptr.hbm [resolvable:$true] %s240
          %243 = dma.vmem_to_hbm [thread:$0]  %s239, 64, %s241, %s225
        $region36: #{tpu_custom_call.1} parent=31 // pred_fallthru
          _
      $region32: #{tpu_custom_call.1} parent=5 // pred_fallthru
        _
      %p244 = scmp.le.s32.totalorder 2, %s12
      // Predicated region
      $region37: #{tpu_custom_call.1} parent=5 // pred_check
        %p245 = pneg %p244
      $region38: #{tpu_custom_call.1} parent=5 // pred_check_branch
        %247 = sbr.rel (%p245) target = $region40
      $region39: #{tpu_custom_call.1} parent=5 // pred_region
        %s248 = ssub.s32 %s12, 2
        // Predicated region
        $region41: #{tpu_custom_call.1} parent=39 // pred_check
          %p249 = pneg %p125
        $region42: #{tpu_custom_call.1} parent=39 // pred_check_branch
          %251 = sbr.rel (%p249) target = $region44
        $region43: #{tpu_custom_call.1} parent=39 // pred_region
          %s252 = sand.u32 %s110, 1
          %s253 = scalar_lea.sflag [#allocation3], %s252
          %s254 = sand.u32 %s110, 1
          %s255 = smul.addr %s254, 4
          %s256 = scalar_lea.vmem [#allocation2], %s255
          %258 = dma.done %s253, 64
        $region44: #{tpu_custom_call.1} parent=39 // pred_fallthru
          _
      $region40: #{tpu_custom_call.1} parent=5 // pred_fallthru
        _
    $region6: #{tpu_custom_call.1} parent=1 // loop_footer
      %s16 = sadd.s32 1, %s12
    $region7: #{tpu_custom_call.1} parent=1 // loop_footer_branch
      %11 = sbr.rel target = $region3
    $region8: #{tpu_custom_call.1} parent=1 // loop_exit
      _
    %259 = vsyncpa [#allocation3], 1
    %s260 = scalar_lea.sflag [#allocation3], 1
    %261 = vsyncpa %s260, 1

</llo_original>
